<compile_context>
chip_gen: v5e
topology: v5e:2x2
jax: 0.10.0
libtpu: 0.0.40
codegen_flags: <defaults>
</compile_context>

<pallas_src>
import functools

import jax
import jax.numpy as jnp
from jax import lax
from jax.experimental import pallas as pl
from jax.experimental.pallas import tpu as pltpu


_SQRT_HALF = 0.7071067811865476


def _erf(z):
    # Abramowitz & Stegun 7.1.26 rational approximation, |abs err| < 1.5e-7.
    # Uses only add/mul/div/exp so it lowers on every TPU generation.
    a1, a2, a3, a4, a5 = (0.254829592, -0.284496736, 1.421413741,
                          -1.453152027, 1.061405429)
    p = 0.3275911
    sign = jnp.where(z >= 0.0, 1.0, -1.0)
    az = jnp.abs(z)
    t = 1.0 / (1.0 + p * az)
    poly = ((((a5 * t + a4) * t + a3) * t + a2) * t + a1) * t
    return sign * (1.0 - poly * jnp.exp(-az * az))


def _gelu_exact(u):
    # nn.GELU() (exact, erf-based) to within ~1.5e-7 absolute.
    return 0.5 * u * (1.0 + _erf(u * _SQRT_HALF))


def vit_block_kernel(x_ref, wqkv_ref, bqkv_ref, wproj_ref, bproj2_ref,
                     w1_ref, b1_ref, w2_ref, b2_ref, colmask_ref, abias_ref,
                     o_ref, *, num_heads, eps_attn=1e-6, eps_mlp=1e-5):
    bb, L, D = x_ref.shape            # bb batch rows handled per grid step
    H = num_heads
    HL = H * L
    rows = bb * L

    # (bb, L, D) -> (bb*L, D) is layout-free (L is a multiple of the 8-sublane tile).
    x = x_ref[...].reshape(rows, D).astype(jnp.float32)

    # ---- LayerNorm(eps=1e-6); affine folded into the QKV weights/bias ----
    mu = jnp.mean(x, axis=-1, keepdims=True)
    xc = x - mu
    var = jnp.mean(xc * xc, axis=-1, keepdims=True)
    xhat = xc * lax.rsqrt(var + eps_attn)

    # ---- qkv = LN(x) @ Wqkv^T  (gamma/beta and 1/sqrt(hd) pre-folded) ----
    qkv = jnp.dot(xhat, wqkv_ref[...],
                  preferred_element_type=jnp.float32) + bqkv_ref[...]   # (rows, 3D)
    q_all = qkv[:, :D]
    k_all = qkv[:, D:2 * D]
    v_all = qkv[:, 2 * D:]

    colmask = colmask_ref[...]        # (H*L, D)  block-diagonal 0/1 column mask
    abias = abias_ref[...]            # (H*L, H*L) 0 on-diagonal blocks, -1e30 off

    def stack_heads(t):               # (L, D) -> (H*L, D): replicate rows per head
        return jnp.concatenate([t] * H, axis=0)

    # ---- all heads of one batch row as ONE block-diagonal score/PV matmul pair ----
    o_parts = []
    for b in range(bb):               # static unroll; bb is capped small (<=8)
        r0 = b * L
        q_r = stack_heads(q_all[r0:r0 + L]) * colmask       # mask q -> block-diag scores
        k_r = stack_heads(k_all[r0:r0 + L])                 # k needs no mask
        v_r = stack_heads(v_all[r0:r0 + L]) * colmask       # mask v -> per-head output cols
        s = lax.dot_general(q_r, k_r, (((1,), (1,)), ((), ())),
                            preferred_element_type=jnp.float32) + abias  # (HL, HL)
        s = s - jnp.max(s, axis=-1, keepdims=True)
        p = jnp.exp(s)
        den = jnp.sum(p, axis=-1, keepdims=True)
        inv = pl.reciprocal(den, approx=True)               # EUP slot
        inv = inv * (2.0 - den * inv)                        # Newton step -> ~f32 accurate
        p = p * inv
        o_r = jnp.dot(p, v_r, preferred_element_type=jnp.float32)       # (HL, D)
        # concat-of-heads == sum over the head-replicated row blocks (zeros elsewhere)
        o_c = o_r[0:L]
        for h in range(1, H):
            o_c = o_c + o_r[h * L:(h + 1) * L]
        o_parts.append(o_c)                                  # (L, D)
    o_attn = o_parts[0] if bb == 1 else jnp.concatenate(o_parts, axis=0)  # (rows, D)

    # ---- Block residual: proj(attn_out) + proj(x) == (attn_out + x) @ Wp^T + 2*bp ----
    y = jnp.dot(o_attn + x, wproj_ref[...],
                preferred_element_type=jnp.float32) + bproj2_ref[...]    # (rows, D)

    # ---- MLP sub-block: LayerNorm(eps=1e-5, affine folded) -> W1 -> GELU -> W2 -> +y ----
    mu2 = jnp.mean(y, axis=-1, keepdims=True)
    yc = y - mu2
    var2 = jnp.mean(yc * yc, axis=-1, keepdims=True)
    yhat = yc * lax.rsqrt(var2 + eps_mlp)
    h = jnp.dot(yhat, w1_ref[...],
                preferred_element_type=jnp.float32) + b1_ref[...]        # (rows, 4D)
    h = _gelu_exact(h)
    out = jnp.dot(h, w2_ref[...],
                  preferred_element_type=jnp.float32) + b2_ref[...] + y  # (rows, D)

    # Single full-block store.
    o_ref[...] = out.reshape(bb, L, D).astype(o_ref.dtype)


def _tensorcores_per_device():
    """TensorCores behind one JAX device (2 on v7x / megacore), via get_tpu_info."""
    try:
        info = pltpu.get_tpu_info()
    except Exception:
        return 1
    for name in ("num_cores", "core_count", "num_tensorcores",
                 "tensorcores_per_chip", "cores_per_chip"):
        n = getattr(info, name, None)
        try:
            if n is not None and int(n) > 0:
                return int(n)
        except (TypeError, ValueError):
            pass
    return 1


def _dimension_semantics(grid_size, core_parallel):
    if core_parallel is None:
        cores = _tensorcores_per_device()
        core_parallel = (cores > 1 and grid_size >= cores
                         and grid_size % cores == 0)
    return (pltpu.CORE_PARALLEL,) if core_parallel else (pltpu.ARBITRARY,)


def make_attention_masks(num_heads, seq_len, dim):
    """Block-diagonal head masks (computed once per model, passed as inputs)."""
    H, L, D = num_heads, seq_len, dim
    hd = D // H
    row_head = jnp.arange(H * L, dtype=jnp.int32) // L
    col_head = jnp.arange(D, dtype=jnp.int32) // hd
    colmask = (row_head[:, None] == col_head[None, :]).astype(jnp.float32)
    same = row_head[:, None] == row_head[None, :]
    abias = jnp.where(same, 0.0, -1e30).astype(jnp.float32)
    return colmask, abias


def prepare_block_params(ln1_gamma, ln1_beta, w_qkv, w_proj, b_proj,
                         ln2_gamma, ln2_beta, w_mlp1, b_mlp1, w_mlp2, b_mlp2,
                         num_heads):
    """One-time parameter prep per Block (do NOT call per forward):
    - transpose weights to the x @ W^T feed layout,
    - fold LayerNorm affines into the adjacent weight/bias,
    - fold the 1/sqrt(head_dim) attention scale into the q columns,
    - fold the Block's proj(x) residual (bias doubles)."""
    f32 = jnp.float32
    D = ln1_gamma.shape[-1]
    assert D % num_heads == 0
    hd = D // num_heads
    scale = hd ** (-0.5)

    wqkv_t = jnp.asarray(w_qkv, f32).T                              # (D, 3D)
    bqkv = jnp.asarray(ln1_beta, f32)[None, :] @ wqkv_t             # (1, 3D)
    wqkv_f = jnp.asarray(ln1_gamma, f32)[:, None] * wqkv_t
    col_scale = jnp.concatenate([jnp.full((D,), scale, f32),
                                 jnp.ones((2 * D,), f32)])[None, :]
    wqkv_f = wqkv_f * col_scale
    bqkv = bqkv * col_scale

    wproj_t = jnp.asarray(w_proj, f32).T                            # (D, D)
    bproj2 = 2.0 * jnp.asarray(b_proj, f32)[None, :]                # (1, D)

    w1_t = jnp.asarray(w_mlp1, f32).T                               # (D, 4D)
    b1_f = (jnp.asarray(b_mlp1, f32)[None, :]
            + jnp.asarray(ln2_beta, f32)[None, :] @ w1_t)           # (1, 4D)
    w1_f = jnp.asarray(ln2_gamma, f32)[:, None] * w1_t
    w2_t = jnp.asarray(w_mlp2, f32).T                               # (4D, D)
    b2 = jnp.asarray(b_mlp2, f32)[None, :]                          # (1, D)

    return (wqkv_f, bqkv, wproj_t, bproj2, w1_f, b1_f, w2_t, b2)


def vit_block(x, block_params, masks, num_heads, *,
              max_batch_block=8, core_parallel=None):
    """Fused Block forward (use_mini=False): x (B, L, D) -> (B, L, D)."""
    B, L, D = x.shape
    assert L % 8 == 0, "seq len must be a multiple of the 8-sublane tile"
    assert D % num_heads == 0
    wqkv_f, bqkv, wproj_t, bproj2, w1_f, b1_f, w2_t, b2 = block_params
    colmask, abias = masks
    hidden = w1_f.shape[1]
    HL = num_heads * L

    bb = max(1, min(B, max_batch_block))
    while B % bb:
        bb -= 1
    grid = (B // bb,)
    sem = _dimension_semantics(grid[0], core_parallel)

    kernel = functools.partial(vit_block_kernel, num_heads=num_heads)
    const2 = lambda i: (0, 0)
    return pl.pallas_call(
        kernel,
        out_shape=jax.ShapeDtypeStruct((B, L, D), x.dtype),
        grid=grid,
        in_specs=[
            pl.BlockSpec((bb, L, D), lambda i: (i, 0, 0)),      # x (batch-tiled)
            pl.BlockSpec((D, 3 * D), const2),                   # Wqkv^T (LN1/scale folded)
            pl.BlockSpec((1, 3 * D), const2),                   # qkv bias (from beta1)
            pl.BlockSpec((D, D), const2),                       # W_proj^T
            pl.BlockSpec((1, D), const2),                       # 2 * b_proj
            pl.BlockSpec((D, hidden), const2),                  # W_mlp1^T (LN2 folded)
            pl.BlockSpec((1, hidden), const2),                  # b_mlp1'
            pl.BlockSpec((hidden, D), const2),                  # W_mlp2^T
            pl.BlockSpec((1, D), const2),                       # b_mlp2
            pl.BlockSpec((HL, D), const2),                      # head column mask
            pl.BlockSpec((HL, HL), const2),                     # attention block bias
        ],
        out_specs=pl.BlockSpec((bb, L, D), lambda i: (i, 0, 0)),
        compiler_params=pltpu.CompilerParams(dimension_semantics=sem),
    )(x, wqkv_f, bqkv, wproj_t, bproj2, w1_f, b1_f, w2_t, b2, colmask, abias)


def cifar_vit_no_mini(x, layer_params, masks, num_heads, **kw):
    """CIFARViT(use_mini=False).forward == `depth` fused Blocks applied to x."""
    for p in layer_params:
        x = vit_block(x, p, masks, num_heads, **kw)
    return x


# ----------------------------- pure-JAX reference -----------------------------
def _block_reference(x, raw, num_heads):
    (g1, b1, wqkv, wp, bp, g2, b2, w1, bm1, w2, bm2) = raw
    B, L, D = x.shape
    hd = D // num_heads
    mu = jnp.mean(x, -1, keepdims=True)
    var = jnp.mean((x - mu) ** 2, -1, keepdims=True)
    xn = (x - mu) / jnp.sqrt(var + 1e-6) * g1 + b1
    qkv = xn @ wqkv.T
    qkv = qkv.reshape(B, L, 3, num_heads, hd).transpose(2, 0, 3, 1, 4)
    q, k, v = qkv[0], qkv[1], qkv[2]
    attn = (q * hd ** (-0.5)) @ jnp.swapaxes(k, -1, -2)
    attn = jax.nn.softmax(attn, -1)
    o = jnp.swapaxes(attn @ v, 1, 2).reshape(B, L, D)
    y = (o @ wp.T + bp) + (x @ wp.T + bp)          # Block: F(x) + proj(x)
    mu2 = jnp.mean(y, -1, keepdims=True)
    var2 = jnp.mean((y - mu2) ** 2, -1, keepdims=True)
    z = (y - mu2) / jnp.sqrt(var2 + 1e-5) * g2 + b2
    h = z @ w1.T + bm1
    h = 0.5 * h * (1.0 + jax.scipy.special.erf(h * _SQRT_HALF))  # exact GELU
    return h @ w2.T + bm2 + y


if __name__ == "__main__":
    # Small CIFARViT(use_mini=False): embed_dim=32, n_head=4, depth=2, seq len 8.
    B, L, D, H, depth, mlp_ratio = 2, 8, 32, 4, 2, 4

    root = jax.random.PRNGKey(0)
    kx, kx2, klayers = jax.random.split(root, 3)
    x = jax.random.normal(kx, (B, L, D), dtype=jnp.float32)

    raw_layers, prepped_layers = [], []
    for lk in jax.random.split(klayers, depth):
        ks = jax.random.split(lk, 11)
        g1 = 1.0 + 0.1 * jax.random.normal(ks[0], (D,), jnp.float32)
        b1 = 0.05 * jax.random.normal(ks[1], (D,), jnp.float32)
        wqkv = 0.05 * jax.random.normal(ks[2], (3 * D, D), jnp.float32)
        wp = 0.05 * jax.random.normal(ks[3], (D, D), jnp.float32)
        bp = 0.05 * jax.random.normal(ks[4], (D,), jnp.float32)
        g2 = 1.0 + 0.1 * jax.random.normal(ks[5], (D,), jnp.float32)
        b2 = 0.05 * jax.random.normal(ks[6], (D,), jnp.float32)
        w1 = 0.05 * jax.random.normal(ks[7], (mlp_ratio * D, D), jnp.float32)
        bm1 = 0.05 * jax.random.normal(ks[8], (mlp_ratio * D,), jnp.float32)
        w2 = 0.05 * jax.random.normal(ks[9], (D, mlp_ratio * D), jnp.float32)
        bm2 = 0.05 * jax.random.normal(ks[10], (D,), jnp.float32)
        raw = (g1, b1, wqkv, wp, bp, g2, b2, w1, bm1, w2, bm2)
        raw_layers.append(raw)
        prepped_layers.append(prepare_block_params(*raw, H))

    masks = make_attention_masks(H, L, D)

    # Primary small-shape run (grid folds to a single step).
    out = jax.block_until_ready(cifar_vit_no_mini(x, prepped_layers, masks, H))
    ref = x
    for raw in raw_layers:
        ref = _block_reference(ref, raw, H)
    assert out.shape == (B, L, D)
    assert jnp.allclose(out, ref, atol=1e-3, rtol=1e-3), "mismatch (B=2)"

    # Larger batch: grid > 1 (batch-chunk pipelining; CORE_PARALLEL on multi-TC chips).
    B2 = 16
    x2 = jax.random.normal(kx2, (B2, L, D), dtype=jnp.float32)
    out2 = jax.block_until_ready(cifar_vit_no_mini(x2, prepped_layers, masks, H))
    ref2 = x2
    for raw in raw_layers:
        ref2 = _block_reference(ref2, raw, H)
    assert jnp.allclose(out2, ref2, atol=1e-3, rtol=1e-3), "mismatch (B=16)"

    print("KERNEL_OK")
</pallas_src>

<mosaic_0001>
module attributes {stable_mosaic.version = 11 : i64} {
  func.func @vit_block_kernel(%arg0: i32, %arg1: memref<2x8x32xf32, #tpu.memory_space<vmem>>, %arg2: memref<32x96xf32, #tpu.memory_space<vmem>>, %arg3: memref<1x96xf32, #tpu.memory_space<vmem>>, %arg4: memref<32x32xf32, #tpu.memory_space<vmem>>, %arg5: memref<1x32xf32, #tpu.memory_space<vmem>>, %arg6: memref<32x128xf32, #tpu.memory_space<vmem>>, %arg7: memref<1x128xf32, #tpu.memory_space<vmem>>, %arg8: memref<128x32xf32, #tpu.memory_space<vmem>>, %arg9: memref<1x32xf32, #tpu.memory_space<vmem>>, %arg10: memref<32x32xf32, #tpu.memory_space<vmem>>, %arg11: memref<32x32xf32, #tpu.memory_space<vmem>>, %arg12: memref<2x8x32xf32, #tpu.memory_space<vmem>>) attributes {dimension_semantics = [#tpu.dimension_semantics<arbitrary>], iteration_bounds = array<i64: 1>, scalar_prefetch = 0 : i64, scratch_operands = 0 : i64, tpu.core_type = #tpu.core_type<tc>, window_params = [{transform_indices = @transform_0, window_bounds = array<i64: 2, 8, 32>}, {pipeline_mode = #tpu.pipeline_mode<synchronous>, transform_indices = @transform_1, window_bounds = array<i64: 32, 96>}, {pipeline_mode = #tpu.pipeline_mode<synchronous>, transform_indices = @transform_2, window_bounds = array<i64: 1, 96>}, {pipeline_mode = #tpu.pipeline_mode<synchronous>, transform_indices = @transform_3, window_bounds = array<i64: 32, 32>}, {pipeline_mode = #tpu.pipeline_mode<synchronous>, transform_indices = @transform_4, window_bounds = array<i64: 1, 32>}, {pipeline_mode = #tpu.pipeline_mode<synchronous>, transform_indices = @transform_5, window_bounds = array<i64: 32, 128>}, {pipeline_mode = #tpu.pipeline_mode<synchronous>, transform_indices = @transform_6, window_bounds = array<i64: 1, 128>}, {pipeline_mode = #tpu.pipeline_mode<synchronous>, transform_indices = @transform_7, window_bounds = array<i64: 128, 32>}, {pipeline_mode = #tpu.pipeline_mode<synchronous>, transform_indices = @transform_8, window_bounds = array<i64: 1, 32>}, {pipeline_mode = #tpu.pipeline_mode<synchronous>, transform_indices = @transform_9, window_bounds = array<i64: 32, 32>}, {pipeline_mode = #tpu.pipeline_mode<synchronous>, transform_indices = @transform_10, window_bounds = array<i64: 32, 32>}, {transform_indices = @transform_11, window_bounds = array<i64: 2, 8, 32>}]} {
    %c0 = arith.constant 0 : index
    %c0_0 = arith.constant 0 : index
    %c0_1 = arith.constant 0 : index
    %0 = vector.load %arg1[%c0, %c0_0, %c0_1] : memref<2x8x32xf32, #tpu.memory_space<vmem>>, vector<2x8x32xf32>
    %1 = vector.shape_cast %0 : vector<2x8x32xf32> to vector<16x32xf32>
    %cst = arith.constant dense<0.000000e+00> : vector<16xf32>
    %2 = vector.multi_reduction <add>, %1, %cst [1] : vector<16x32xf32> to vector<16xf32>
    %3 = vector.shape_cast %2 : vector<16xf32> to vector<16x1xf32>
    %cst_2 = arith.constant 3.200000e+01 : f32
    %4 = vector.broadcast %cst_2 : f32 to vector<16x1xf32>
    %5 = arith.divf %3, %4 : vector<16x1xf32>
    %6 = vector.broadcast %5 : vector<16x1xf32> to vector<16x32xf32>
    %7 = arith.subf %1, %6 : vector<16x32xf32>
    %8 = arith.mulf %7, %7 : vector<16x32xf32>
    %cst_3 = arith.constant dense<0.000000e+00> : vector<16xf32>
    %9 = vector.multi_reduction <add>, %8, %cst_3 [1] : vector<16x32xf32> to vector<16xf32>
    %10 = vector.shape_cast %9 : vector<16xf32> to vector<16x1xf32>
    %cst_4 = arith.constant 3.200000e+01 : f32
    %11 = vector.broadcast %cst_4 : f32 to vector<16x1xf32>
    %12 = arith.divf %10, %11 : vector<16x1xf32>
    %cst_5 = arith.constant 9.99999997E-7 : f32
    %13 = vector.broadcast %cst_5 : f32 to vector<16x1xf32>
    %14 = arith.addf %12, %13 : vector<16x1xf32>
    %15 = math.rsqrt %14 : vector<16x1xf32>
    %16 = vector.broadcast %15 : vector<16x1xf32> to vector<16x32xf32>
    %17 = arith.mulf %7, %16 : vector<16x32xf32>
    %c0_6 = arith.constant 0 : index
    %c0_7 = arith.constant 0 : index
    %18 = vector.load %arg2[%c0_6, %c0_7] : memref<32x96xf32, #tpu.memory_space<vmem>>, vector<32x96xf32>
    %cst_8 = arith.constant dense<0.000000e+00> : vector<16x96xf32>
    %19 = tpu.matmul %17, %18, %cst_8 {dimension_numbers = #tpu.dot_dimension_numbers<[1], [0], [0], [1], [0, 0, 1, 1], [], []>} : vector<16x32xf32>, vector<32x96xf32>, vector<16x96xf32> -> vector<16x96xf32>
    %c0_9 = arith.constant 0 : index
    %c0_10 = arith.constant 0 : index
    %20 = vector.load %arg3[%c0_9, %c0_10] : memref<1x96xf32, #tpu.memory_space<vmem>>, vector<1x96xf32>
    %21 = vector.broadcast %20 : vector<1x96xf32> to vector<16x96xf32>
    %22 = arith.addf %19, %21 : vector<16x96xf32>
    %23 = vector.extract_strided_slice %22 {offsets = [0, 0], sizes = [16, 32], strides = [1, 1]} : vector<16x96xf32> to vector<16x32xf32>
    %24 = vector.extract_strided_slice %22 {offsets = [0, 32], sizes = [16, 32], strides = [1, 1]} : vector<16x96xf32> to vector<16x32xf32>
    %25 = vector.extract_strided_slice %22 {offsets = [0, 64], sizes = [16, 32], strides = [1, 1]} : vector<16x96xf32> to vector<16x32xf32>
    %c0_11 = arith.constant 0 : index
    %c0_12 = arith.constant 0 : index
    %26 = vector.load %arg10[%c0_11, %c0_12] : memref<32x32xf32, #tpu.memory_space<vmem>>, vector<32x32xf32>
    %c0_13 = arith.constant 0 : index
    %c0_14 = arith.constant 0 : index
    %27 = vector.load %arg11[%c0_13, %c0_14] : memref<32x32xf32, #tpu.memory_space<vmem>>, vector<32x32xf32>
    %28 = vector.extract_strided_slice %23 {offsets = [0, 0], sizes = [8, 32], strides = [1, 1]} : vector<16x32xf32> to vector<8x32xf32>
    %29 = tpu.concatenate %28, %28, %28, %28 in 0 : vector<8x32xf32>, vector<8x32xf32>, vector<8x32xf32>, vector<8x32xf32> -> vector<32x32xf32>
    %30 = arith.mulf %29, %26 : vector<32x32xf32>
    %31 = vector.extract_strided_slice %24 {offsets = [0, 0], sizes = [8, 32], strides = [1, 1]} : vector<16x32xf32> to vector<8x32xf32>
    %32 = tpu.concatenate %31, %31, %31, %31 in 0 : vector<8x32xf32>, vector<8x32xf32>, vector<8x32xf32>, vector<8x32xf32> -> vector<32x32xf32>
    %33 = vector.extract_strided_slice %25 {offsets = [0, 0], sizes = [8, 32], strides = [1, 1]} : vector<16x32xf32> to vector<8x32xf32>
    %34 = tpu.concatenate %33, %33, %33, %33 in 0 : vector<8x32xf32>, vector<8x32xf32>, vector<8x32xf32>, vector<8x32xf32> -> vector<32x32xf32>
    %35 = arith.mulf %34, %26 : vector<32x32xf32>
    %cst_15 = arith.constant dense<0.000000e+00> : vector<32x32xf32>
    %36 = tpu.matmul %30, %32, %cst_15 {dimension_numbers = #tpu.dot_dimension_numbers<[1], [1], [0], [0], [0, 0, 1, 0], [], []>} : vector<32x32xf32>, vector<32x32xf32>, vector<32x32xf32> -> vector<32x32xf32>
    %37 = arith.addf %36, %27 : vector<32x32xf32>
    %cst_16 = arith.constant dense<0xFF800000> : vector<32xf32>
    %38 = vector.multi_reduction <maximumf>, %37, %cst_16 [1] : vector<32x32xf32> to vector<32xf32>
    %39 = vector.shape_cast %38 : vector<32xf32> to vector<32x1xf32>
    %40 = vector.broadcast %39 : vector<32x1xf32> to vector<32x32xf32>
    %41 = arith.subf %37, %40 : vector<32x32xf32>
    %42 = math.exp %41 : vector<32x32xf32>
    %cst_17 = arith.constant dense<0.000000e+00> : vector<32xf32>
    %43 = vector.multi_reduction <add>, %42, %cst_17 [1] : vector<32x32xf32> to vector<32xf32>
    %44 = vector.shape_cast %43 : vector<32xf32> to vector<32x1xf32>
    %45 = tpu.reciprocal %44 {approx = true} : vector<32x1xf32> -> vector<32x1xf32>
    %46 = arith.mulf %44, %45 : vector<32x1xf32>
    %cst_18 = arith.constant 2.000000e+00 : f32
    %47 = vector.broadcast %cst_18 : f32 to vector<32x1xf32>
    %48 = arith.subf %47, %46 : vector<32x1xf32>
    %49 = arith.mulf %45, %48 : vector<32x1xf32>
    %50 = vector.broadcast %49 : vector<32x1xf32> to vector<32x32xf32>
    %51 = arith.mulf %42, %50 : vector<32x32xf32>
    %cst_19 = arith.constant dense<0.000000e+00> : vector<32x32xf32>
    %52 = tpu.matmul %51, %35, %cst_19 {dimension_numbers = #tpu.dot_dimension_numbers<[1], [0], [0], [1], [0, 0, 1, 1], [], []>} : vector<32x32xf32>, vector<32x32xf32>, vector<32x32xf32> -> vector<32x32xf32>
    %53 = vector.extract_strided_slice %52 {offsets = [0, 0], sizes = [8, 32], strides = [1, 1]} : vector<32x32xf32> to vector<8x32xf32>
    %54 = vector.extract_strided_slice %52 {offsets = [8, 0], sizes = [8, 32], strides = [1, 1]} : vector<32x32xf32> to vector<8x32xf32>
    %55 = arith.addf %53, %54 : vector<8x32xf32>
    %56 = vector.extract_strided_slice %52 {offsets = [16, 0], sizes = [8, 32], strides = [1, 1]} : vector<32x32xf32> to vector<8x32xf32>
    %57 = arith.addf %55, %56 : vector<8x32xf32>
    %58 = vector.extract_strided_slice %52 {offsets = [24, 0], sizes = [8, 32], strides = [1, 1]} : vector<32x32xf32> to vector<8x32xf32>
    %59 = arith.addf %57, %58 : vector<8x32xf32>
    %60 = vector.extract_strided_slice %23 {offsets = [8, 0], sizes = [8, 32], strides = [1, 1]} : vector<16x32xf32> to vector<8x32xf32>
    %61 = tpu.concatenate %60, %60, %60, %60 in 0 : vector<8x32xf32>, vector<8x32xf32>, vector<8x32xf32>, vector<8x32xf32> -> vector<32x32xf32>
    %62 = arith.mulf %61, %26 : vector<32x32xf32>
    %63 = vector.extract_strided_slice %24 {offsets = [8, 0], sizes = [8, 32], strides = [1, 1]} : vector<16x32xf32> to vector<8x32xf32>
    %64 = tpu.concatenate %63, %63, %63, %63 in 0 : vector<8x32xf32>, vector<8x32xf32>, vector<8x32xf32>, vector<8x32xf32> -> vector<32x32xf32>
    %65 = vector.extract_strided_slice %25 {offsets = [8, 0], sizes = [8, 32], strides = [1, 1]} : vector<16x32xf32> to vector<8x32xf32>
    %66 = tpu.concatenate %65, %65, %65, %65 in 0 : vector<8x32xf32>, vector<8x32xf32>, vector<8x32xf32>, vector<8x32xf32> -> vector<32x32xf32>
    %67 = arith.mulf %66, %26 : vector<32x32xf32>
    %cst_20 = arith.constant dense<0.000000e+00> : vector<32x32xf32>
    %68 = tpu.matmul %62, %64, %cst_20 {dimension_numbers = #tpu.dot_dimension_numbers<[1], [1], [0], [0], [0, 0, 1, 0], [], []>} : vector<32x32xf32>, vector<32x32xf32>, vector<32x32xf32> -> vector<32x32xf32>
    %69 = arith.addf %68, %27 : vector<32x32xf32>
    %cst_21 = arith.constant dense<0xFF800000> : vector<32xf32>
    %70 = vector.multi_reduction <maximumf>, %69, %cst_21 [1] : vector<32x32xf32> to vector<32xf32>
    %71 = vector.shape_cast %70 : vector<32xf32> to vector<32x1xf32>
    %72 = vector.broadcast %71 : vector<32x1xf32> to vector<32x32xf32>
    %73 = arith.subf %69, %72 : vector<32x32xf32>
    %74 = math.exp %73 : vector<32x32xf32>
    %cst_22 = arith.constant dense<0.000000e+00> : vector<32xf32>
    %75 = vector.multi_reduction <add>, %74, %cst_22 [1] : vector<32x32xf32> to vector<32xf32>
    %76 = vector.shape_cast %75 : vector<32xf32> to vector<32x1xf32>
    %77 = tpu.reciprocal %76 {approx = true} : vector<32x1xf32> -> vector<32x1xf32>
    %78 = arith.mulf %76, %77 : vector<32x1xf32>
    %cst_23 = arith.constant 2.000000e+00 : f32
    %79 = vector.broadcast %cst_23 : f32 to vector<32x1xf32>
    %80 = arith.subf %79, %78 : vector<32x1xf32>
    %81 = arith.mulf %77, %80 : vector<32x1xf32>
    %82 = vector.broadcast %81 : vector<32x1xf32> to vector<32x32xf32>
    %83 = arith.mulf %74, %82 : vector<32x32xf32>
    %cst_24 = arith.constant dense<0.000000e+00> : vector<32x32xf32>
    %84 = tpu.matmul %83, %67, %cst_24 {dimension_numbers = #tpu.dot_dimension_numbers<[1], [0], [0], [1], [0, 0, 1, 1], [], []>} : vector<32x32xf32>, vector<32x32xf32>, vector<32x32xf32> -> vector<32x32xf32>
    %85 = vector.extract_strided_slice %84 {offsets = [0, 0], sizes = [8, 32], strides = [1, 1]} : vector<32x32xf32> to vector<8x32xf32>
    %86 = vector.extract_strided_slice %84 {offsets = [8, 0], sizes = [8, 32], strides = [1, 1]} : vector<32x32xf32> to vector<8x32xf32>
    %87 = arith.addf %85, %86 : vector<8x32xf32>
    %88 = vector.extract_strided_slice %84 {offsets = [16, 0], sizes = [8, 32], strides = [1, 1]} : vector<32x32xf32> to vector<8x32xf32>
    %89 = arith.addf %87, %88 : vector<8x32xf32>
    %90 = vector.extract_strided_slice %84 {offsets = [24, 0], sizes = [8, 32], strides = [1, 1]} : vector<32x32xf32> to vector<8x32xf32>
    %91 = arith.addf %89, %90 : vector<8x32xf32>
    %92 = tpu.concatenate %59, %91 in 0 : vector<8x32xf32>, vector<8x32xf32> -> vector<16x32xf32>
    %93 = arith.addf %92, %1 : vector<16x32xf32>
    %c0_25 = arith.constant 0 : index
    %c0_26 = arith.constant 0 : index
    %94 = vector.load %arg4[%c0_25, %c0_26] : memref<32x32xf32, #tpu.memory_space<vmem>>, vector<32x32xf32>
    %cst_27 = arith.constant dense<0.000000e+00> : vector<16x32xf32>
    %95 = tpu.matmul %93, %94, %cst_27 {dimension_numbers = #tpu.dot_dimension_numbers<[1], [0], [0], [1], [0, 0, 1, 1], [], []>} : vector<16x32xf32>, vector<32x32xf32>, vector<16x32xf32> -> vector<16x32xf32>
    %c0_28 = arith.constant 0 : index
    %c0_29 = arith.constant 0 : index
    %96 = vector.load %arg5[%c0_28, %c0_29] : memref<1x32xf32, #tpu.memory_space<vmem>>, vector<1x32xf32>
    %97 = vector.broadcast %96 : vector<1x32xf32> to vector<16x32xf32>
    %98 = arith.addf %95, %97 : vector<16x32xf32>
    %cst_30 = arith.constant dense<0.000000e+00> : vector<16xf32>
    %99 = vector.multi_reduction <add>, %98, %cst_30 [1] : vector<16x32xf32> to vector<16xf32>
    %100 = vector.shape_cast %99 : vector<16xf32> to vector<16x1xf32>
    %cst_31 = arith.constant 3.200000e+01 : f32
    %101 = vector.broadcast %cst_31 : f32 to vector<16x1xf32>
    %102 = arith.divf %100, %101 : vector<16x1xf32>
    %103 = vector.broadcast %102 : vector<16x1xf32> to vector<16x32xf32>
    %104 = arith.subf %98, %103 : vector<16x32xf32>
    %105 = arith.mulf %104, %104 : vector<16x32xf32>
    %cst_32 = arith.constant dense<0.000000e+00> : vector<16xf32>
    %106 = vector.multi_reduction <add>, %105, %cst_32 [1] : vector<16x32xf32> to vector<16xf32>
    %107 = vector.shape_cast %106 : vector<16xf32> to vector<16x1xf32>
    %cst_33 = arith.constant 3.200000e+01 : f32
    %108 = vector.broadcast %cst_33 : f32 to vector<16x1xf32>
    %109 = arith.divf %107, %108 : vector<16x1xf32>
    %cst_34 = arith.constant 9.99999974E-6 : f32
    %110 = vector.broadcast %cst_34 : f32 to vector<16x1xf32>
    %111 = arith.addf %109, %110 : vector<16x1xf32>
    %112 = math.rsqrt %111 : vector<16x1xf32>
    %113 = vector.broadcast %112 : vector<16x1xf32> to vector<16x32xf32>
    %114 = arith.mulf %104, %113 : vector<16x32xf32>
    %c0_35 = arith.constant 0 : index
    %c0_36 = arith.constant 0 : index
    %115 = vector.load %arg6[%c0_35, %c0_36] : memref<32x128xf32, #tpu.memory_space<vmem>>, vector<32x128xf32>
    %cst_37 = arith.constant dense<0.000000e+00> : vector<16x128xf32>
    %116 = tpu.matmul %114, %115, %cst_37 {dimension_numbers = #tpu.dot_dimension_numbers<[1], [0], [0], [1], [0, 0, 1, 1], [], []>} : vector<16x32xf32>, vector<32x128xf32>, vector<16x128xf32> -> vector<16x128xf32>
    %c0_38 = arith.constant 0 : index
    %c0_39 = arith.constant 0 : index
    %117 = vector.load %arg7[%c0_38, %c0_39] : memref<1x128xf32, #tpu.memory_space<vmem>>, vector<1x128xf32>
    %118 = vector.broadcast %117 : vector<1x128xf32> to vector<16x128xf32>
    %119 = arith.addf %116, %118 : vector<16x128xf32>
    %cst_40 = arith.constant 5.000000e-01 : f32
    %120 = vector.broadcast %cst_40 : f32 to vector<16x128xf32>
    %121 = arith.mulf %120, %119 : vector<16x128xf32>
    %cst_41 = arith.constant 0.707106769 : f32
    %122 = vector.broadcast %cst_41 : f32 to vector<16x128xf32>
    %123 = arith.mulf %119, %122 : vector<16x128xf32>
    %cst_42 = arith.constant 0.000000e+00 : f32
    %124 = vector.broadcast %cst_42 : f32 to vector<16x128xf32>
    %125 = arith.cmpf oge, %123, %124 : vector<16x128xf32>
    %cst_43 = arith.constant 1.000000e+00 : f32
    %cst_44 = arith.constant -1.000000e+00 : f32
    %126 = vector.broadcast %cst_43 : f32 to vector<16x128xf32>
    %127 = vector.broadcast %cst_44 : f32 to vector<16x128xf32>
    %128 = arith.select %125, %126, %127 : vector<16x128xi1>, vector<16x128xf32>
    %129 = math.absf %123 : vector<16x128xf32>
    %cst_45 = arith.constant 0.327591091 : f32
    %130 = vector.broadcast %cst_45 : f32 to vector<16x128xf32>
    %131 = arith.mulf %130, %129 : vector<16x128xf32>
    %cst_46 = arith.constant 1.000000e+00 : f32
    %132 = vector.broadcast %cst_46 : f32 to vector<16x128xf32>
    %133 = arith.addf %132, %131 : vector<16x128xf32>
    %cst_47 = arith.constant 1.000000e+00 : f32
    %134 = vector.broadcast %cst_47 : f32 to vector<16x128xf32>
    %135 = arith.divf %134, %133 : vector<16x128xf32>
    %cst_48 = arith.constant 1.06140542 : f32
    %136 = vector.broadcast %cst_48 : f32 to vector<16x128xf32>
    %137 = arith.mulf %136, %135 : vector<16x128xf32>
    %cst_49 = arith.constant -1.45315206 : f32
    %138 = vector.broadcast %cst_49 : f32 to vector<16x128xf32>
    %139 = arith.addf %137, %138 : vector<16x128xf32>
    %140 = arith.mulf %139, %135 : vector<16x128xf32>
    %cst_50 = arith.constant 1.42141378 : f32
    %141 = vector.broadcast %cst_50 : f32 to vector<16x128xf32>
    %142 = arith.addf %140, %141 : vector<16x128xf32>
    %143 = arith.mulf %142, %135 : vector<16x128xf32>
    %cst_51 = arith.constant -0.284496725 : f32
    %144 = vector.broadcast %cst_51 : f32 to vector<16x128xf32>
    %145 = arith.addf %143, %144 : vector<16x128xf32>
    %146 = arith.mulf %145, %135 : vector<16x128xf32>
    %cst_52 = arith.constant 0.254829586 : f32
    %147 = vector.broadcast %cst_52 : f32 to vector<16x128xf32>
    %148 = arith.addf %146, %147 : vector<16x128xf32>
    %149 = arith.mulf %148, %135 : vector<16x128xf32>
    %cst_53 = arith.constant 0.000000e+00 : f32
    %150 = vector.broadcast %cst_53 : f32 to vector<16x128xf32>
    %151 = arith.subf %150, %129 : vector<16x128xf32>
    %152 = arith.mulf %151, %129 : vector<16x128xf32>
    %153 = math.exp %152 : vector<16x128xf32>
    %154 = arith.mulf %149, %153 : vector<16x128xf32>
    %cst_54 = arith.constant 1.000000e+00 : f32
    %155 = vector.broadcast %cst_54 : f32 to vector<16x128xf32>
    %156 = arith.subf %155, %154 : vector<16x128xf32>
    %157 = arith.mulf %128, %156 : vector<16x128xf32>
    %cst_55 = arith.constant 1.000000e+00 : f32
    %158 = vector.broadcast %cst_55 : f32 to vector<16x128xf32>
    %159 = arith.addf %158, %157 : vector<16x128xf32>
    %160 = arith.mulf %121, %159 : vector<16x128xf32>
    %c0_56 = arith.constant 0 : index
    %c0_57 = arith.constant 0 : index
    %161 = vector.load %arg8[%c0_56, %c0_57] : memref<128x32xf32, #tpu.memory_space<vmem>>, vector<128x32xf32>
    %cst_58 = arith.constant dense<0.000000e+00> : vector<16x32xf32>
    %162 = tpu.matmul %160, %161, %cst_58 {dimension_numbers = #tpu.dot_dimension_numbers<[1], [0], [0], [1], [0, 0, 1, 1], [], []>} : vector<16x128xf32>, vector<128x32xf32>, vector<16x32xf32> -> vector<16x32xf32>
    %c0_59 = arith.constant 0 : index
    %c0_60 = arith.constant 0 : index
    %163 = vector.load %arg9[%c0_59, %c0_60] : memref<1x32xf32, #tpu.memory_space<vmem>>, vector<1x32xf32>
    %164 = vector.broadcast %163 : vector<1x32xf32> to vector<16x32xf32>
    %165 = arith.addf %162, %164 : vector<16x32xf32>
    %166 = arith.addf %165, %98 : vector<16x32xf32>
    %167 = vector.shape_cast %166 : vector<16x32xf32> to vector<2x8x32xf32>
    %c0_61 = arith.constant 0 : index
    %c0_62 = arith.constant 0 : index
    %c0_63 = arith.constant 0 : index
    %168 = vector.load %arg12[%c0_61, %c0_62, %c0_63] : memref<2x8x32xf32, #tpu.memory_space<vmem>>, vector<2x8x32xf32>
    tpu.vector_store %arg12[%c0_61, %c0_62, %c0_63], %167 {strides = array<i32>} : memref<2x8x32xf32, #tpu.memory_space<vmem>>, vector<2x8x32xf32>,
    return
  }
  func.func @transform_0(%arg0: i32) -> (i32, i32, i32) {
    %c0_i32 = arith.constant 0 : i32
    %c0_i32_0 = arith.constant 0 : i32
    %c0_i32_1 = arith.constant 0 : i32
    return %arg0, %c0_i32, %c0_i32_0 : i32, i32, i32
  }
  func.func @transform_1(%arg0: i32) -> (i32, i32) {
    %c0_i32 = arith.constant 0 : i32
    %c0_i32_0 = arith.constant 0 : i32
    %c0_i32_1 = arith.constant 0 : i32
    return %c0_i32, %c0_i32_0 : i32, i32
  }
  func.func @transform_2(%arg0: i32) -> (i32, i32) {
    %c0_i32 = arith.constant 0 : i32
    %c0_i32_0 = arith.constant 0 : i32
    %c0_i32_1 = arith.constant 0 : i32
    return %c0_i32, %c0_i32_0 : i32, i32
  }
  func.func @transform_3(%arg0: i32) -> (i32, i32) {
    %c0_i32 = arith.constant 0 : i32
    %c0_i32_0 = arith.constant 0 : i32
    %c0_i32_1 = arith.constant 0 : i32
    return %c0_i32, %c0_i32_0 : i32, i32
  }
  func.func @transform_4(%arg0: i32) -> (i32, i32) {
    %c0_i32 = arith.constant 0 : i32
    %c0_i32_0 = arith.constant 0 : i32
    %c0_i32_1 = arith.constant 0 : i32
    return %c0_i32, %c0_i32_0 : i32, i32
  }
  func.func @transform_5(%arg0: i32) -> (i32, i32) {
    %c0_i32 = arith.constant 0 : i32
    %c0_i32_0 = arith.constant 0 : i32
    %c0_i32_1 = arith.constant 0 : i32
    return %c0_i32, %c0_i32_0 : i32, i32
  }
  func.func @transform_6(%arg0: i32) -> (i32, i32) {
    %c0_i32 = arith.constant 0 : i32
    %c0_i32_0 = arith.constant 0 : i32
    %c0_i32_1 = arith.constant 0 : i32
    return %c0_i32, %c0_i32_0 : i32, i32
  }
  func.func @transform_7(%arg0: i32) -> (i32, i32) {
    %c0_i32 = arith.constant 0 : i32
    %c0_i32_0 = arith.constant 0 : i32
    %c0_i32_1 = arith.constant 0 : i32
    return %c0_i32, %c0_i32_0 : i32, i32
  }
  func.func @transform_8(%arg0: i32) -> (i32, i32) {
    %c0_i32 = arith.constant 0 : i32
    %c0_i32_0 = arith.constant 0 : i32
    %c0_i32_1 = arith.constant 0 : i32
    return %c0_i32, %c0_i32_0 : i32, i32
  }
  func.func @transform_9(%arg0: i32) -> (i32, i32) {
    %c0_i32 = arith.constant 0 : i32
    %c0_i32_0 = arith.constant 0 : i32
    %c0_i32_1 = arith.constant 0 : i32
    return %c0_i32, %c0_i32_0 : i32, i32
  }
  func.func @transform_10(%arg0: i32) -> (i32, i32) {
    %c0_i32 = arith.constant 0 : i32
    %c0_i32_0 = arith.constant 0 : i32
    %c0_i32_1 = arith.constant 0 : i32
    return %c0_i32, %c0_i32_0 : i32, i32
  }
  func.func @transform_11(%arg0: i32) -> (i32, i32, i32) {
    %c0_i32 = arith.constant 0 : i32
    %c0_i32_0 = arith.constant 0 : i32
    %c0_i32_1 = arith.constant 0 : i32
    return %arg0, %c0_i32, %c0_i32_0 : i32, i32, i32
  }
}

</mosaic_0001>

<llo_original>
// kernel: tpu_custom_call.1
$region0: #{tpu_custom_call.1}
  #allocation0 [shape = 'u32[]', space=smem, size = 0x4, offset = 0x4, fixed_abs, tag = 'smem constant byte address 0x4 - core index']
  #allocation1 [shape = 'u32[72,128]{1,0:T(1,128)}', space=vmem, size = 0x9000, scoped, tag = 'internal scratch']
  %s0 = inlined_call_operand.hbm [shape: f32[2,8,32], index: 0, kind: input, shape index: {}]
  %s1 = inlined_call_operand.vmem [shape: f32[32,96], index: 1, kind: input, shape index: {}]
  %s2 = inlined_call_operand.vmem [shape: f32[1,96], index: 2, kind: input, shape index: {}]
  %s3 = inlined_call_operand.vmem [shape: f32[32,32], index: 3, kind: input, shape index: {}]
  %s4 = inlined_call_operand.vmem [shape: f32[1,32], index: 4, kind: input, shape index: {}]
  %s5 = inlined_call_operand.vmem [shape: f32[32,128], index: 5, kind: input, shape index: {}]
  %s6 = inlined_call_operand.vmem [shape: f32[1,128], index: 6, kind: input, shape index: {}]
  %s7 = inlined_call_operand.vmem [shape: f32[128,32], index: 7, kind: input, shape index: {}]
  %s8 = inlined_call_operand.vmem [shape: f32[1,32], index: 8, kind: input, shape index: {}]
  %s9 = inlined_call_operand.vmem [shape: f32[32,32], index: 9, kind: input, shape index: {}]
  %s10 = inlined_call_operand.vmem [shape: f32[32,32], index: 10, kind: input, shape index: {}]
  %s11 = inlined_call_operand.hbm [shape: f32[2,8,32], index: 11, kind: output, shape index: {}]
  %s12 = sld [smem:[#allocation0]]
  $region58: #{tpu_custom_call.1} parent=0
    _
  %s14 = ssub.s32 1, %s12
  %s15 = scalar_select 0, %s14, %s12
  $region1: #{tpu_custom_call.1} parent=0
    #allocation2 [shape = 'u8[8192]{0}', space=vmem, size = 0x2000, scoped, tag = 'input window, operand 0, single buffered']
    #allocation3 [shape = 's32[1]{0}', space=sflag, size = 0x4, scoped, tag = 'scoped memory for tpu_custom_call.1']
    #allocation4 [shape = 's32[1]{0}', space=sflag, size = 0x4, scoped, tag = 'scoped memory for tpu_custom_call.1']
    #allocation5 [shape = 'u8[8192]{0}', space=vmem, size = 0x2000, scoped, tag = 'output window, operand 0, single buffered']
    %16 = vsyncpa [#allocation3], 0
    %17 = vsyncpa [#allocation4], 0
    // Predicated region
    $region2: #{tpu_custom_call.1} parent=1 // pred_check
      _
    $region3: #{tpu_custom_call.1} parent=1 // pred_check_branch
      %19 = sbr.rel (0) target = $region5
    $region4: #{tpu_custom_call.1} parent=1 // pred_region
      %21 = vsyncadd [#allocation3], 0
      %s22 = sshll.u32 %s0, 4
      %s23 = int_to_ptr.hbm [resolvable:$true] %s22
      %s24 = sshll.u32 [#allocation2], 4
      %s25 = int_to_ptr.vmem [resolvable:$true] %s24
      %30 = dma.hbm_to_vmem [thread:$0]  %s23, 256, %s25, [#allocation3], 128, 128, 8
    $region5: #{tpu_custom_call.1} parent=1 // pred_fallthru
      _
    // Predicated region
    $region6: #{tpu_custom_call.1} parent=1 // pred_check
      _
    $region7: #{tpu_custom_call.1} parent=1 // pred_check_branch
      %32 = sbr.rel (0) target = $region9
    $region8: #{tpu_custom_call.1} parent=1 // pred_region
      _
    $region9: #{tpu_custom_call.1} parent=1 // pred_fallthru
      _
    // Predicated region
    $region10: #{tpu_custom_call.1} parent=1 // pred_check
      _
    $region11: #{tpu_custom_call.1} parent=1 // pred_check_branch
      %34 = sbr.rel (0) target = $region13
    $region12: #{tpu_custom_call.1} parent=1 // pred_region
      _
    $region13: #{tpu_custom_call.1} parent=1 // pred_fallthru
      _
    // Predicated region
    $region14: #{tpu_custom_call.1} parent=1 // pred_check
      _
    $region15: #{tpu_custom_call.1} parent=1 // pred_check_branch
      %36 = sbr.rel (0) target = $region17
    $region16: #{tpu_custom_call.1} parent=1 // pred_region
      _
    $region17: #{tpu_custom_call.1} parent=1 // pred_fallthru
      _
    // Predicated region
    $region18: #{tpu_custom_call.1} parent=1 // pred_check
      _
    $region19: #{tpu_custom_call.1} parent=1 // pred_check_branch
      %38 = sbr.rel (0) target = $region21
    $region20: #{tpu_custom_call.1} parent=1 // pred_region
      _
    $region21: #{tpu_custom_call.1} parent=1 // pred_fallthru
      _
    // Predicated region
    $region22: #{tpu_custom_call.1} parent=1 // pred_check
      _
    $region23: #{tpu_custom_call.1} parent=1 // pred_check_branch
      %40 = sbr.rel (0) target = $region25
    $region24: #{tpu_custom_call.1} parent=1 // pred_region
      _
    $region25: #{tpu_custom_call.1} parent=1 // pred_fallthru
      _
    // Predicated region
    $region26: #{tpu_custom_call.1} parent=1 // pred_check
      _
    $region27: #{tpu_custom_call.1} parent=1 // pred_check_branch
      %42 = sbr.rel (0) target = $region29
    $region28: #{tpu_custom_call.1} parent=1 // pred_region
      _
    $region29: #{tpu_custom_call.1} parent=1 // pred_fallthru
      _
    // Predicated region
    $region30: #{tpu_custom_call.1} parent=1 // pred_check
      _
    $region31: #{tpu_custom_call.1} parent=1 // pred_check_branch
      %44 = sbr.rel (0) target = $region33
    $region32: #{tpu_custom_call.1} parent=1 // pred_region
      _
    $region33: #{tpu_custom_call.1} parent=1 // pred_fallthru
      _
    // Predicated region
    $region34: #{tpu_custom_call.1} parent=1 // pred_check
      _
    $region35: #{tpu_custom_call.1} parent=1 // pred_check_branch
      %46 = sbr.rel (0) target = $region37
    $region36: #{tpu_custom_call.1} parent=1 // pred_region
      _
    $region37: #{tpu_custom_call.1} parent=1 // pred_fallthru
      _
    // Predicated region
    $region38: #{tpu_custom_call.1} parent=1 // pred_check
      _
    $region39: #{tpu_custom_call.1} parent=1 // pred_check_branch
      %48 = sbr.rel (0) target = $region41
    $region40: #{tpu_custom_call.1} parent=1 // pred_region
      _
    $region41: #{tpu_custom_call.1} parent=1 // pred_fallthru
      _
    // Predicated region
    $region42: #{tpu_custom_call.1} parent=1 // pred_check
      _
    $region43: #{tpu_custom_call.1} parent=1 // pred_check_branch
      %50 = sbr.rel (0) target = $region45
    $region44: #{tpu_custom_call.1} parent=1 // pred_region
      _
    $region45: #{tpu_custom_call.1} parent=1 // pred_fallthru
      _
    // Predicated region
    $region46: #{tpu_custom_call.1} parent=1 // pred_check
      _
    $region47: #{tpu_custom_call.1} parent=1 // pred_check_branch
      %52 = sbr.rel (0) target = $region49
    $region48: #{tpu_custom_call.1} parent=1 // pred_region
      %54 = dma.done [#allocation3], 256
    $region49: #{tpu_custom_call.1} parent=1 // pred_fallthru
      _
    %v55 = vld [vmem:[#allocation2] sm:$0xff]
    %v56 = vld [vmem:[#allocation2 + $0x8] sm:$0xff]
    %vm57 = vcmask 261120
    %v58 = vsel %vm57, %v55, 0.0
    %59 = vadd.xlane.f32.xlu0 %v58
    %v60 = vpop.xlane.xlu0 %59
    %v61 = vsel %vm57, %v56, 0.0
    %62 = vadd.xlane.f32.xlu0 %v61
    %v63 = vpop.xlane.xlu0 %62
    %v64 = vrcp.pop 32.0
    %v65 = vmul.f32 32.0, %v64
    %v66 = vsub.f32 1.0, %v65
    %v67 = vmul.f32 %v64, %v66
    %v68 = vadd.f32 %v64, %v67
    %vm69 = vweird.f32 %v64
    %v70 = vsel %vm69, %v64, %v68
    %v71 = vmul.f32 %v60, %v70
    %v72 = vmul.f32 %v63, %v70
    %v73 = vsub.f32 %v55, %v71
    %v74 = vsub.f32 %v56, %v72
    %v75 = vmul.f32 %v73, %v73
    %v76 = vmul.f32 %v74, %v74
    %v77 = vsel %vm57, %v75, 0.0
    %78 = vadd.xlane.f32.xlu0 %v77
    %v79 = vpop.xlane.xlu0 %78
    %v80 = vsel %vm57, %v76, 0.0
    %81 = vadd.xlane.f32.xlu0 %v80
    %v82 = vpop.xlane.xlu0 %81
    %v83 = vmul.f32 %v79, %v70
    %v84 = vmul.f32 %v82, %v70
    %v85 = vadd.f32 %v83, 1e-06
    %v86 = vadd.f32 %v84, 1e-06
    %v87 = vrsqrt.pop %v85
    %v88 = vmul.f32 %v87, %v85
    %v89 = vmul.f32 %v88, %v87
    %v90 = vmul.f32 0.5, %v89
    %v91 = vsub.f32 1.5, %v90
    %v92 = vmul.f32 %v87, %v91
    %vm93 = vweird.f32 %v85
    %vm94 = vweird.f32 %v87
    %vm95 = vmor %vm93, %vm94
    %v96 = vsel %vm95, %v87, %v92
    %v97 = vrsqrt.pop %v86
    %v98 = vmul.f32 %v97, %v86
    %v99 = vmul.f32 %v98, %v97
    %v100 = vmul.f32 0.5, %v99
    %v101 = vsub.f32 1.5, %v100
    %v102 = vmul.f32 %v97, %v101
    %vm103 = vweird.f32 %v86
    %vm104 = vweird.f32 %v97
    %vm105 = vmor %vm103, %vm104
    %v106 = vsel %vm105, %v97, %v102
    %v107 = vmul.f32 %v73, %v96
    %v108 = vmul.f32 %v74, %v106
    %v109 = vld [vmem:[%s1] sm:$0xff]
    %v110 = vld [vmem:[%s1 + $0x8] sm:$0xff]
    %v111 = vld [vmem:[%s1 + $0x10] sm:$0xff]
    %v112 = vld [vmem:[%s1 + $0x18] sm:$0xff]
    %v113 = vld [vmem:[%s2] sm:$0x1]
    %v115 = vperm.slane %v113, 0
    %v118 = vsel %vm57, %v107, 0
    %v121 = vsel %vm57, %v108, 0
    %123 = vmatpush.msra.mxu0 0.0
    %124 = vmatpush.msra.mxu0 0.0
    %125 = vmatpush.msra.mxu0 0.0
    %126 = vmatpush.msra.mxu0 0.0
    %127 = vmatpush.msra.mxu0 0.0
    %128 = vmatpush.msra.mxu0 0.0
    %129 = vmatpush.msra.mxu0 0.0
    %130 = vmatpush.msra.mxu0 0.0
    %131 = vmatpush.msra.mxu0 0.0
    %132 = vmatpush.msra.mxu0 0.0
    %133 = vmatpush.msra.mxu0 0.0
    %134 = vmatpush.msra.mxu0 0.0
    %135 = vmatpush.msra.mxu0 %v112
    %136 = vmatpush.msra.mxu0 %v111
    %137 = vmatpush.msra.mxu0 %v110
    %138 = vmatpush.msra.mxu0 %v109
    %139 = vmatmul.f32.gmra.mxu0 %v118
    %v140 = vpop.f32.mrf.mxu0
    %v141 = vadd.f32 %v115, %v140
    %142 = vmatmul.f32.gmra.mxu0 %v121
    %v143 = vpop.f32.mrf.mxu0
    %v144 = vadd.f32 %v115, %v143
    %145 = vdwg.mxu0
    %v146 = vld [vmem:[%s9] sm:$0xff]
    %v147 = vld [vmem:[%s9 + $0x8] sm:$0xff]
    %v148 = vld [vmem:[%s9 + $0x10] sm:$0xff]
    %v149 = vld [vmem:[%s9 + $0x18] sm:$0xff]
    %v150 = vld [vmem:[%s10] sm:$0xff]
    %v151 = vld [vmem:[%s10 + $0x8] sm:$0xff]
    %v152 = vld [vmem:[%s10 + $0x10] sm:$0xff]
    %v153 = vld [vmem:[%s10 + $0x18] sm:$0xff]
    %v154 = vmul.f32 %v141, %v146
    %v155 = vmul.f32 %v141, %v147
    %v156 = vmul.f32 %v141, %v148
    %v157 = vmul.f32 %v141, %v149
    %162 = vrot.lane.b32.xlu0 %v146, 64
    %v163 = vpop.permute.xlu0 %162
    %164 = vrot.lane.b32.xlu0 %v147, 64
    %v165 = vpop.permute.xlu0 %164
    %166 = vrot.lane.b32.xlu0 %v148, 64
    %v167 = vpop.permute.xlu0 %166
    %168 = vrot.lane.b32.xlu0 %v149, 64
    %v169 = vpop.permute.xlu0 %168
    %v174 = vmul.f32 %v141, %v163
    %v175 = vmul.f32 %v141, %v165
    %v176 = vmul.f32 %v141, %v167
    %v177 = vmul.f32 %v141, %v169
    %179 = vrot.lane.b32.xlu0 %v141, 96
    %v180 = vpop.permute.xlu0 %179
    %v182 = vsel %vm57, %v154, 0
    %v185 = vsel %vm57, %v155, 0
    %v188 = vsel %vm57, %v156, 0
    %v191 = vsel %vm57, %v157, 0
    %v193 = vsel %vm57, %v180, 0
    %195 = vmatpush.xpose.msra.mxu0 0.0
    %196 = vmatpush.xpose.msra.mxu0 0.0
    %197 = vmatpush.xpose.msra.mxu0 0.0
    %198 = vmatpush.xpose.msra.mxu0 0.0
    %199 = vmatpush.xpose.msra.mxu0 0.0
    %200 = vmatpush.xpose.msra.mxu0 0.0
    %201 = vmatpush.xpose.msra.mxu0 0.0
    %202 = vmatpush.xpose.msra.mxu0 0.0
    %203 = vmatpush.xpose.msra.mxu0 0.0
    %204 = vmatpush.xpose.msra.mxu0 0.0
    %205 = vmatpush.xpose.msra.mxu0 0.0
    %206 = vmatpush.xpose.msra.mxu0 0.0
    %207 = vmatpush.xpose.msra.mxu0 %v193
    %208 = vmatpush.xpose.msra.mxu0 %v193
    %209 = vmatpush.xpose.msra.mxu0 %v193
    %210 = vmatpush.xpose.msra.mxu0 %v193
    %211 = vmatmul.f32.gmra.mxu0 %v182
    %v212 = vpop.f32.mrf.mxu0
    %v213 = vadd.f32 %v150, %v212
    %214 = vmatmul.f32.gmra.mxu0 %v185
    %v215 = vpop.f32.mrf.mxu0
    %v216 = vadd.f32 %v151, %v215
    %217 = vmatmul.f32.gmra.mxu0 %v188
    %v218 = vpop.f32.mrf.mxu0
    %v219 = vadd.f32 %v152, %v218
    %220 = vmatmul.f32.gmra.mxu0 %v191
    %v221 = vpop.f32.mrf.mxu0
    %v222 = vadd.f32 %v153, %v221
    %223 = vdwg.mxu0
    %v224 = vsel %vm57, %v213, -inf
    %225 = vmax.xlane.f32.xlu0 %v224
    %v226 = vpop.xlane.xlu0 %225
    %v227 = vsel %vm57, %v216, -inf
    %228 = vmax.xlane.f32.xlu0 %v227
    %v229 = vpop.xlane.xlu0 %228
    %v230 = vsel %vm57, %v219, -inf
    %231 = vmax.xlane.f32.xlu0 %v230
    %v232 = vpop.xlane.xlu0 %231
    %v233 = vsel %vm57, %v222, -inf
    %234 = vmax.xlane.f32.xlu0 %v233
    %v235 = vpop.xlane.xlu0 %234
    %v236 = vsub.f32 %v213, %v226
    %v237 = vsub.f32 %v216, %v229
    %v238 = vsub.f32 %v219, %v232
    %v239 = vsub.f32 %v222, %v235
    %v240 = vmul.f32 %v236, 1.442695
    %v241 = vpow.pop %v240
    %v242 = vmul.f32 %v237, 1.442695
    %v243 = vpow.pop %v242
    %v244 = vmul.f32 %v238, 1.442695
    %v245 = vpow.pop %v244
    %v246 = vmul.f32 %v239, 1.442695
    %v247 = vpow.pop %v246
    %v248 = vsel %vm57, %v241, 0.0
    %249 = vadd.xlane.f32.xlu0 %v248
    %v250 = vpop.xlane.xlu0 %249
    %v251 = vsel %vm57, %v243, 0.0
    %252 = vadd.xlane.f32.xlu0 %v251
    %v253 = vpop.xlane.xlu0 %252
    %v254 = vsel %vm57, %v245, 0.0
    %255 = vadd.xlane.f32.xlu0 %v254
    %v256 = vpop.xlane.xlu0 %255
    %v257 = vsel %vm57, %v247, 0.0
    %258 = vadd.xlane.f32.xlu0 %v257
    %v259 = vpop.xlane.xlu0 %258
    %v260 = vrcp.pop %v250
    %v261 = vrcp.pop %v253
    %v262 = vrcp.pop %v256
    %v263 = vrcp.pop %v259
    %v264 = vmul.f32 %v250, %v260
    %v265 = vmul.f32 %v253, %v261
    %v266 = vmul.f32 %v256, %v262
    %v267 = vmul.f32 %v259, %v263
    %v268 = vsub.f32 2.0, %v264
    %v269 = vsub.f32 2.0, %v265
    %v270 = vsub.f32 2.0, %v266
    %v271 = vsub.f32 2.0, %v267
    %v272 = vmul.f32 %v260, %v268
    %v273 = vmul.f32 %v261, %v269
    %v274 = vmul.f32 %v262, %v270
    %v275 = vmul.f32 %v263, %v271
    %v276 = vmul.f32 %v241, %v272
    %v277 = vmul.f32 %v243, %v273
    %v278 = vmul.f32 %v245, %v274
    %v279 = vmul.f32 %v247, %v275
    %284 = vrot.lane.b32.xlu0 %v174, 64
    %v285 = vpop.permute.xlu0 %284
    %286 = vrot.lane.b32.xlu0 %v175, 64
    %v287 = vpop.permute.xlu0 %286
    %288 = vrot.lane.b32.xlu0 %v176, 64
    %v289 = vpop.permute.xlu0 %288
    %290 = vrot.lane.b32.xlu0 %v177, 64
    %v291 = vpop.permute.xlu0 %290
    %v297 = vsel %vm57, %v276, 0
    %v300 = vsel %vm57, %v277, 0
    %v303 = vsel %vm57, %v278, 0
    %v306 = vsel %vm57, %v279, 0
    %308 = vmatpush.msra.mxu0 0.0
    %309 = vmatpush.msra.mxu0 0.0
    %310 = vmatpush.msra.mxu0 0.0
    %311 = vmatpush.msra.mxu0 0.0
    %312 = vmatpush.msra.mxu0 0.0
    %313 = vmatpush.msra.mxu0 0.0
    %314 = vmatpush.msra.mxu0 0.0
    %315 = vmatpush.msra.mxu0 0.0
    %316 = vmatpush.msra.mxu0 0.0
    %317 = vmatpush.msra.mxu0 0.0
    %318 = vmatpush.msra.mxu0 0.0
    %319 = vmatpush.msra.mxu0 0.0
    %320 = vmatpush.msra.mxu0 %v291
    %321 = vmatpush.msra.mxu0 %v289
    %322 = vmatpush.msra.mxu0 %v287
    %323 = vmatpush.msra.mxu0 %v285
    %324 = vmatmul.f32.gmra.mxu0 %v297
    %v325 = vpop.f32.mrf.mxu0
    %v326 = vadd.f32 0.0, %v325
    %327 = vmatmul.f32.gmra.mxu0 %v300
    %v328 = vpop.f32.mrf.mxu0
    %v329 = vadd.f32 0.0, %v328
    %330 = vmatmul.f32.gmra.mxu0 %v303
    %v331 = vpop.f32.mrf.mxu0
    %v332 = vadd.f32 0.0, %v331
    %333 = vmatmul.f32.gmra.mxu0 %v306
    %v334 = vpop.f32.mrf.mxu0
    %v335 = vadd.f32 0.0, %v334
    %336 = vdwg.mxu0
    %v337 = vadd.f32 %v326, %v329
    %v338 = vadd.f32 %v337, %v332
    %v339 = vadd.f32 %v338, %v335
    %v340 = vmul.f32 %v144, %v146
    %v341 = vmul.f32 %v144, %v147
    %v342 = vmul.f32 %v144, %v148
    %v343 = vmul.f32 %v144, %v149
    %v344 = vmul.f32 %v144, %v163
    %v345 = vmul.f32 %v144, %v165
    %v346 = vmul.f32 %v144, %v167
    %v347 = vmul.f32 %v144, %v169
    %349 = vrot.lane.b32.xlu0 %v144, 96
    %v350 = vpop.permute.xlu0 %349
    %v352 = vsel %vm57, %v340, 0
    %v355 = vsel %vm57, %v341, 0
    %v358 = vsel %vm57, %v342, 0
    %v361 = vsel %vm57, %v343, 0
    %v363 = vsel %vm57, %v350, 0
    %365 = vmatpush.xpose.msra.mxu0 0.0
    %366 = vmatpush.xpose.msra.mxu0 0.0
    %367 = vmatpush.xpose.msra.mxu0 0.0
    %368 = vmatpush.xpose.msra.mxu0 0.0
    %369 = vmatpush.xpose.msra.mxu0 0.0
    %370 = vmatpush.xpose.msra.mxu0 0.0
    %371 = vmatpush.xpose.msra.mxu0 0.0
    %372 = vmatpush.xpose.msra.mxu0 0.0
    %373 = vmatpush.xpose.msra.mxu0 0.0
    %374 = vmatpush.xpose.msra.mxu0 0.0
    %375 = vmatpush.xpose.msra.mxu0 0.0
    %376 = vmatpush.xpose.msra.mxu0 0.0
    %377 = vmatpush.xpose.msra.mxu0 %v363
    %378 = vmatpush.xpose.msra.mxu0 %v363
    %379 = vmatpush.xpose.msra.mxu0 %v363
    %380 = vmatpush.xpose.msra.mxu0 %v363
    %381 = vmatmul.f32.gmra.mxu0 %v352
    %v382 = vpop.f32.mrf.mxu0
    %v383 = vadd.f32 %v150, %v382
    %384 = vmatmul.f32.gmra.mxu0 %v355
    %v385 = vpop.f32.mrf.mxu0
    %v386 = vadd.f32 %v151, %v385
    %387 = vmatmul.f32.gmra.mxu0 %v358
    %v388 = vpop.f32.mrf.mxu0
    %v389 = vadd.f32 %v152, %v388
    %390 = vmatmul.f32.gmra.mxu0 %v361
    %v391 = vpop.f32.mrf.mxu0
    %v392 = vadd.f32 %v153, %v391
    %393 = vdwg.mxu0
    %v394 = vsel %vm57, %v383, -inf
    %395 = vmax.xlane.f32.xlu0 %v394
    %v396 = vpop.xlane.xlu0 %395
    %v397 = vsel %vm57, %v386, -inf
    %398 = vmax.xlane.f32.xlu0 %v397
    %v399 = vpop.xlane.xlu0 %398
    %v400 = vsel %vm57, %v389, -inf
    %401 = vmax.xlane.f32.xlu0 %v400
    %v402 = vpop.xlane.xlu0 %401
    %v403 = vsel %vm57, %v392, -inf
    %404 = vmax.xlane.f32.xlu0 %v403
    %v405 = vpop.xlane.xlu0 %404
    %v406 = vsub.f32 %v383, %v396
    %v407 = vsub.f32 %v386, %v399
    %v408 = vsub.f32 %v389, %v402
    %v409 = vsub.f32 %v392, %v405
    %v410 = vmul.f32 %v406, 1.442695
    %v411 = vpow.pop %v410
    %v412 = vmul.f32 %v407, 1.442695
    %v413 = vpow.pop %v412
    %v414 = vmul.f32 %v408, 1.442695
    %v415 = vpow.pop %v414
    %v416 = vmul.f32 %v409, 1.442695
    %v417 = vpow.pop %v416
    %v418 = vsel %vm57, %v411, 0.0
    %419 = vadd.xlane.f32.xlu0 %v418
    %v420 = vpop.xlane.xlu0 %419
    %v421 = vsel %vm57, %v413, 0.0
    %422 = vadd.xlane.f32.xlu0 %v421
    %v423 = vpop.xlane.xlu0 %422
    %v424 = vsel %vm57, %v415, 0.0
    %425 = vadd.xlane.f32.xlu0 %v424
    %v426 = vpop.xlane.xlu0 %425
    %v427 = vsel %vm57, %v417, 0.0
    %428 = vadd.xlane.f32.xlu0 %v427
    %v429 = vpop.xlane.xlu0 %428
    %v430 = vrcp.pop %v420
    %v431 = vrcp.pop %v423
    %v432 = vrcp.pop %v426
    %v433 = vrcp.pop %v429
    %v434 = vmul.f32 %v420, %v430
    %v435 = vmul.f32 %v423, %v431
    %v436 = vmul.f32 %v426, %v432
    %v437 = vmul.f32 %v429, %v433
    %v438 = vsub.f32 2.0, %v434
    %v439 = vsub.f32 2.0, %v435
    %v440 = vsub.f32 2.0, %v436
    %v441 = vsub.f32 2.0, %v437
    %v442 = vmul.f32 %v430, %v438
    %v443 = vmul.f32 %v431, %v439
    %v444 = vmul.f32 %v432, %v440
    %v445 = vmul.f32 %v433, %v441
    %v446 = vmul.f32 %v411, %v442
    %v447 = vmul.f32 %v413, %v443
    %v448 = vmul.f32 %v415, %v444
    %v449 = vmul.f32 %v417, %v445
    %454 = vrot.lane.b32.xlu0 %v344, 64
    %v455 = vpop.permute.xlu0 %454
    %456 = vrot.lane.b32.xlu0 %v345, 64
    %v457 = vpop.permute.xlu0 %456
    %458 = vrot.lane.b32.xlu0 %v346, 64
    %v459 = vpop.permute.xlu0 %458
    %460 = vrot.lane.b32.xlu0 %v347, 64
    %v461 = vpop.permute.xlu0 %460
    %v467 = vsel %vm57, %v446, 0
    %v470 = vsel %vm57, %v447, 0
    %v473 = vsel %vm57, %v448, 0
    %v476 = vsel %vm57, %v449, 0
    %478 = vmatpush.msra.mxu0 0.0
    %479 = vmatpush.msra.mxu0 0.0
    %480 = vmatpush.msra.mxu0 0.0
    %481 = vmatpush.msra.mxu0 0.0
    %482 = vmatpush.msra.mxu0 0.0
    %483 = vmatpush.msra.mxu0 0.0
    %484 = vmatpush.msra.mxu0 0.0
    %485 = vmatpush.msra.mxu0 0.0
    %486 = vmatpush.msra.mxu0 0.0
    %487 = vmatpush.msra.mxu0 0.0
    %488 = vmatpush.msra.mxu0 0.0
    %489 = vmatpush.msra.mxu0 0.0
    %490 = vmatpush.msra.mxu0 %v461
    %491 = vmatpush.msra.mxu0 %v459
    %492 = vmatpush.msra.mxu0 %v457
    %493 = vmatpush.msra.mxu0 %v455
    %494 = vmatmul.f32.gmra.mxu0 %v467
    %v495 = vpop.f32.mrf.mxu0
    %v496 = vadd.f32 0.0, %v495
    %497 = vmatmul.f32.gmra.mxu0 %v470
    %v498 = vpop.f32.mrf.mxu0
    %v499 = vadd.f32 0.0, %v498
    %500 = vmatmul.f32.gmra.mxu0 %v473
    %v501 = vpop.f32.mrf.mxu0
    %v502 = vadd.f32 0.0, %v501
    %503 = vmatmul.f32.gmra.mxu0 %v476
    %v504 = vpop.f32.mrf.mxu0
    %v505 = vadd.f32 0.0, %v504
    %506 = vdwg.mxu0
    %v507 = vadd.f32 %v496, %v499
    %v508 = vadd.f32 %v507, %v502
    %v509 = vadd.f32 %v508, %v505
    %v510 = vadd.f32 %v339, %v55
    %v511 = vadd.f32 %v509, %v56
    %v512 = vld [vmem:[%s3] sm:$0xff]
    %v513 = vld [vmem:[%s3 + $0x8] sm:$0xff]
    %v514 = vld [vmem:[%s3 + $0x10] sm:$0xff]
    %v515 = vld [vmem:[%s3 + $0x18] sm:$0xff]
    %v516 = vld [vmem:[%s4] sm:$0x1]
    %v518 = vperm.slane %v516, 0
    %v521 = vsel %vm57, %v510, 0
    %v524 = vsel %vm57, %v511, 0
    %526 = vmatpush.msra.mxu0 0.0
    %527 = vmatpush.msra.mxu0 0.0
    %528 = vmatpush.msra.mxu0 0.0
    %529 = vmatpush.msra.mxu0 0.0
    %530 = vmatpush.msra.mxu0 0.0
    %531 = vmatpush.msra.mxu0 0.0
    %532 = vmatpush.msra.mxu0 0.0
    %533 = vmatpush.msra.mxu0 0.0
    %534 = vmatpush.msra.mxu0 0.0
    %535 = vmatpush.msra.mxu0 0.0
    %536 = vmatpush.msra.mxu0 0.0
    %537 = vmatpush.msra.mxu0 0.0
    %538 = vmatpush.msra.mxu0 %v515
    %539 = vmatpush.msra.mxu0 %v514
    %540 = vmatpush.msra.mxu0 %v513
    %541 = vmatpush.msra.mxu0 %v512
    %542 = vmatmul.f32.gmra.mxu0 %v521
    %v543 = vpop.f32.mrf.mxu0
    %v544 = vadd.f32 %v518, %v543
    %545 = vmatmul.f32.gmra.mxu0 %v524
    %v546 = vpop.f32.mrf.mxu0
    %v547 = vadd.f32 %v518, %v546
    %548 = vdwg.mxu0
    %v549 = vsel %vm57, %v544, 0.0
    %550 = vadd.xlane.f32.xlu0 %v549
    %v551 = vpop.xlane.xlu0 %550
    %v552 = vsel %vm57, %v547, 0.0
    %553 = vadd.xlane.f32.xlu0 %v552
    %v554 = vpop.xlane.xlu0 %553
    %v555 = vmul.f32 %v551, %v70
    %v556 = vmul.f32 %v554, %v70
    %v557 = vsub.f32 %v544, %v555
    %v558 = vsub.f32 %v547, %v556
    %v559 = vmul.f32 %v557, %v557
    %v560 = vmul.f32 %v558, %v558
    %v561 = vsel %vm57, %v559, 0.0
    %562 = vadd.xlane.f32.xlu0 %v561
    %v563 = vpop.xlane.xlu0 %562
    %v564 = vsel %vm57, %v560, 0.0
    %565 = vadd.xlane.f32.xlu0 %v564
    %v566 = vpop.xlane.xlu0 %565
    %v567 = vmul.f32 %v563, %v70
    %v568 = vmul.f32 %v566, %v70
    %v569 = vadd.f32 %v567, 1e-05
    %v570 = vadd.f32 %v568, 1e-05
    %v571 = vrsqrt.pop %v569
    %v572 = vmul.f32 %v571, %v569
    %v573 = vmul.f32 %v572, %v571
    %v574 = vmul.f32 0.5, %v573
    %v575 = vsub.f32 1.5, %v574
    %v576 = vmul.f32 %v571, %v575
    %vm577 = vweird.f32 %v569
    %vm578 = vweird.f32 %v571
    %vm579 = vmor %vm577, %vm578
    %v580 = vsel %vm579, %v571, %v576
    %v581 = vrsqrt.pop %v570
    %v582 = vmul.f32 %v581, %v570
    %v583 = vmul.f32 %v582, %v581
    %v584 = vmul.f32 0.5, %v583
    %v585 = vsub.f32 1.5, %v584
    %v586 = vmul.f32 %v581, %v585
    %vm587 = vweird.f32 %v570
    %vm588 = vweird.f32 %v581
    %vm589 = vmor %vm587, %vm588
    %v590 = vsel %vm589, %v581, %v586
    %v591 = vmul.f32 %v557, %v580
    %v592 = vmul.f32 %v558, %v590
    %v593 = vld [vmem:[%s5] sm:$0xff]
    %v594 = vld [vmem:[%s5 + $0x8] sm:$0xff]
    %v595 = vld [vmem:[%s5 + $0x10] sm:$0xff]
    %v596 = vld [vmem:[%s5 + $0x18] sm:$0xff]
    %v597 = vld [vmem:[%s6] sm:$0x1]
    %v599 = vperm.slane %v597, 0
    %v602 = vsel %vm57, %v591, 0
    %v605 = vsel %vm57, %v592, 0
    %607 = vmatpush.msra.mxu0 0.0
    %608 = vmatpush.msra.mxu0 0.0
    %609 = vmatpush.msra.mxu0 0.0
    %610 = vmatpush.msra.mxu0 0.0
    %611 = vmatpush.msra.mxu0 0.0
    %612 = vmatpush.msra.mxu0 0.0
    %613 = vmatpush.msra.mxu0 0.0
    %614 = vmatpush.msra.mxu0 0.0
    %615 = vmatpush.msra.mxu0 0.0
    %616 = vmatpush.msra.mxu0 0.0
    %617 = vmatpush.msra.mxu0 0.0
    %618 = vmatpush.msra.mxu0 0.0
    %619 = vmatpush.msra.mxu0 %v596
    %620 = vmatpush.msra.mxu0 %v595
    %621 = vmatpush.msra.mxu0 %v594
    %622 = vmatpush.msra.mxu0 %v593
    %623 = vmatmul.f32.gmra.mxu0 %v602
    %v624 = vpop.f32.mrf.mxu0
    %v625 = vadd.f32 %v599, %v624
    %626 = vmatmul.f32.gmra.mxu0 %v605
    %v627 = vpop.f32.mrf.mxu0
    %v628 = vadd.f32 %v599, %v627
    %629 = vdwg.mxu0
    %v630 = vmul.f32 %v625, 0.5
    %v631 = vmul.f32 %v628, 0.5
    %v632 = vmul.f32 %v625, 0.70710677
    %v633 = vmul.f32 %v628, 0.70710677
    %vm634 = vcmp.ge.f32.partialorder %v632, 0.0
    %vm635 = vcmp.ge.f32.partialorder %v633, 0.0
    %v636 = vsel %vm634, 1.0, -1.0
    %v637 = vsel %vm635, 1.0, -1.0
    %v638 = vand.u32 2147483647, %v632
    %v639 = vand.u32 2147483647, %v633
    %v640 = vmul.f32 %v638, 0.3275911
    %v641 = vmul.f32 %v639, 0.3275911
    %v642 = vadd.f32 %v640, 1.0
    %v643 = vadd.f32 %v641, 1.0
    %v644 = vrcp.pop %v642
    %v645 = vmul.f32 %v642, %v644
    %v646 = vsub.f32 1.0, %v645
    %v647 = vmul.f32 %v644, %v646
    %v648 = vadd.f32 %v644, %v647
    %vm649 = vweird.f32 %v642
    %vm650 = vweird.f32 %v644
    %vm651 = vmor %vm649, %vm650
    %v652 = vsel %vm651, %v644, %v648
    %v653 = vand.u32 2147483647, %v642
    %vm654 = vcmp.eq.f32.partialorder %v653, 8.507059e+37
    %v655 = vand.u32 %v642, 2147483648
    %v656 = vor.u32 1.1754944e-38, %v655
    %v657 = vsel %vm654, %v656, %v652
    %v658 = vmul.f32 1.0, %v657
    %v659 = vrcp.pop %v643
    %v660 = vmul.f32 %v643, %v659
    %v661 = vsub.f32 1.0, %v660
    %v662 = vmul.f32 %v659, %v661
    %v663 = vadd.f32 %v659, %v662
    %vm664 = vweird.f32 %v643
    %vm665 = vweird.f32 %v659
    %vm666 = vmor %vm664, %vm665
    %v667 = vsel %vm666, %v659, %v663
    %v668 = vand.u32 2147483647, %v643
    %vm669 = vcmp.eq.f32.partialorder %v668, 8.507059e+37
    %v670 = vand.u32 %v643, 2147483648
    %v671 = vor.u32 1.1754944e-38, %v670
    %v672 = vsel %vm669, %v671, %v667
    %v673 = vmul.f32 1.0, %v672
    %v674 = vmul.f32 %v658, 1.0614054
    %v675 = vmul.f32 %v673, 1.0614054
    %v676 = vadd.f32 %v674, -1.4531521
    %v677 = vadd.f32 %v675, -1.4531521
    %v678 = vmul.f32 %v676, %v658
    %v679 = vmul.f32 %v677, %v673
    %v680 = vadd.f32 %v678, 1.4214138
    %v681 = vadd.f32 %v679, 1.4214138
    %v682 = vmul.f32 %v680, %v658
    %v683 = vmul.f32 %v681, %v673
    %v684 = vadd.f32 %v682, -0.28449672
    %v685 = vadd.f32 %v683, -0.28449672
    %v686 = vmul.f32 %v684, %v658
    %v687 = vmul.f32 %v685, %v673
    %v688 = vadd.f32 %v686, 0.2548296
    %v689 = vadd.f32 %v687, 0.2548296
    %v690 = vmul.f32 %v688, %v658
    %v691 = vmul.f32 %v689, %v673
    %v692 = vsub.f32 0.0, %v638
    %v693 = vsub.f32 0.0, %v639
    %v694 = vmul.f32 %v692, %v638
    %v695 = vmul.f32 %v693, %v639
    %v696 = vmul.f32 %v694, 1.442695
    %v697 = vpow.pop %v696
    %v698 = vmul.f32 %v695, 1.442695
    %v699 = vpow.pop %v698
    %v700 = vmul.f32 %v690, %v697
    %v701 = vmul.f32 %v691, %v699
    %v702 = vsub.f32 1.0, %v700
    %v703 = vsub.f32 1.0, %v701
    %v704 = vmul.f32 %v636, %v702
    %v705 = vmul.f32 %v637, %v703
    %v706 = vadd.f32 %v704, 1.0
    %v707 = vadd.f32 %v705, 1.0
    %v708 = vmul.f32 %v630, %v706
    %v709 = vmul.f32 %v631, %v707
    %v710 = vld [vmem:[%s7] sm:$0xff]
    %v711 = vld [vmem:[%s7 + $0x8] sm:$0xff]
    %v712 = vld [vmem:[%s7 + $0x10] sm:$0xff]
    %v713 = vld [vmem:[%s7 + $0x18] sm:$0xff]
    %v714 = vld [vmem:[%s7 + $0x20] sm:$0xff]
    %v715 = vld [vmem:[%s7 + $0x28] sm:$0xff]
    %v716 = vld [vmem:[%s7 + $0x30] sm:$0xff]
    %v717 = vld [vmem:[%s7 + $0x38] sm:$0xff]
    %v718 = vld [vmem:[%s7 + $0x40] sm:$0xff]
    %v719 = vld [vmem:[%s7 + $0x48] sm:$0xff]
    %v720 = vld [vmem:[%s7 + $0x50] sm:$0xff]
    %v721 = vld [vmem:[%s7 + $0x58] sm:$0xff]
    %v722 = vld [vmem:[%s7 + $0x60] sm:$0xff]
    %v723 = vld [vmem:[%s7 + $0x68] sm:$0xff]
    %v724 = vld [vmem:[%s7 + $0x70] sm:$0xff]
    %v725 = vld [vmem:[%s7 + $0x78] sm:$0xff]
    %v726 = vld [vmem:[%s8] sm:$0x1]
    %v728 = vperm.slane %v726, 0
    %730 = vmatpush.msra.mxu0 %v725
    %731 = vmatpush.msra.mxu0 %v724
    %732 = vmatpush.msra.mxu0 %v723
    %733 = vmatpush.msra.mxu0 %v722
    %734 = vmatpush.msra.mxu0 %v721
    %735 = vmatpush.msra.mxu0 %v720
    %736 = vmatpush.msra.mxu0 %v719
    %737 = vmatpush.msra.mxu0 %v718
    %738 = vmatpush.msra.mxu0 %v717
    %739 = vmatpush.msra.mxu0 %v716
    %740 = vmatpush.msra.mxu0 %v715
    %741 = vmatpush.msra.mxu0 %v714
    %742 = vmatpush.msra.mxu0 %v713
    %743 = vmatpush.msra.mxu0 %v712
    %744 = vmatpush.msra.mxu0 %v711
    %745 = vmatpush.msra.mxu0 %v710
    %746 = vmatmul.f32.gmra.mxu0 %v708
    %v747 = vpop.f32.mrf.mxu0
    %v748 = vadd.f32 %v728, %v747
    %749 = vmatmul.f32.gmra.mxu0 %v709
    %v750 = vpop.f32.mrf.mxu0
    %v751 = vadd.f32 %v728, %v750
    %752 = vdwg.mxu0
    %v753 = vadd.f32 %v748, %v544
    %v754 = vadd.f32 %v751, %v547
    %755 = vst.msk [vmem:[#allocation5] sm:$0xff] %vm57, %v753
    %756 = vst.msk [vmem:[#allocation5 + $0x8] sm:$0xff] %vm57, %v754
    // Predicated region
    $region50: #{tpu_custom_call.1} parent=1 // pred_check
      _
    $region51: #{tpu_custom_call.1} parent=1 // pred_check_branch
      %758 = sbr.rel (0) target = $region53
    $region52: #{tpu_custom_call.1} parent=1 // pred_region
      %760 = vsyncadd [#allocation4], 0
      %s761 = sshll.u32 [#allocation5], 4
      %s762 = int_to_ptr.vmem [resolvable:$true] %s761
      %s763 = sshll.u32 %s11, 4
      %s764 = int_to_ptr.hbm [resolvable:$true] %s763
      %769 = dma.vmem_to_hbm [thread:$0]  %s762, 256, %s764, [#allocation4], 128, 128, 8
    $region53: #{tpu_custom_call.1} parent=1 // pred_fallthru
      _
    // Predicated region
    $region54: #{tpu_custom_call.1} parent=1 // pred_check
      _
    $region55: #{tpu_custom_call.1} parent=1 // pred_check_branch
      %771 = sbr.rel (0) target = $region57
    $region56: #{tpu_custom_call.1} parent=1 // pred_region
      %773 = dma.done [#allocation4], 256
    $region57: #{tpu_custom_call.1} parent=1 // pred_fallthru
      _
    %774 = vsyncpa [#allocation3], 1
    %775 = vsyncpa [#allocation4], 1

</llo_original>
